<compile_context>
chip_gen: v6e
topology: v6e:2x2x1
jax: 0.10.0
libtpu: 0.0.40
codegen_flags: <defaults>
</compile_context>

<pallas_src>
import functools
import math

import jax
import jax.numpy as jnp
from jax.experimental import pallas as pl
from jax.experimental.pallas import tpu as pltpu


# ------------------------------- kernel -------------------------------------


def _mean_over_nodes_kernel(x_ref, o_ref, acc_ref, *, inv_n, unroll_nodes):
    """One grid step: fold one block of nodes into the f32 accumulator.

    x_ref   : (tL, nB, tM)   input block (node axis in the middle)
    o_ref   : (tL, tM)       output block, dtype = input dtype
    acc_ref : (tL, tM) f32   resident accumulator (VMEM scratch)
    """
    n = pl.program_id(2)

    @pl.when(n == 0)
    def _init():
        acc_ref[...] = jnp.zeros_like(acc_ref)

    if unroll_nodes:
        # Small node block: unrolled slice-adds stay on the plentiful
        # vld + VALU slots instead of a cross-sublane XLU reduce + relayout.
        s = x_ref[:, 0, :].astype(jnp.float32)
        for k in range(1, unroll_nodes):
            s = s + x_ref[:, k, :].astype(jnp.float32)
    else:
        s = jnp.sum(x_ref[...].astype(jnp.float32), axis=1)
    acc_ref[...] += s  # exactly one accumulator RMW per grid step

    @pl.when(n == pl.num_programs(2) - 1)
    def _finalize():
        o_ref[...] = (acc_ref[...] * inv_n).astype(o_ref.dtype)


# --------------------------- tiling heuristics -------------------------------

_FALLBACK_VMEM_CAP = 64 * 2**20   # v7x per-TensorCore VMEM (most conservative)
_VMEM_HEADROOM = 8 * 2**20        # Mosaic internal scratch headroom
_MIN_PALLAS_BYTES = 2 * 2**20     # below this, XLA's fused reduce wins


def _vmem_capacity_bytes():
    try:
        cap = getattr(pltpu.get_tpu_info(), "vmem_capacity_bytes", None)
        if cap:
            return int(cap)
    except Exception:
        pass
    return _FALLBACK_VMEM_CAP


def _divisors_desc(dim):
    small, large = [], []
    i = 1
    while i * i <= dim:
        if dim % i == 0:
            small.append(i)
            if i != dim // i:
                large.append(dim // i)
        i += 1
    return large + small[::-1]  # descending


def _tile_candidates(dim, align):
    """Divisors of `dim` that are multiples of `align`, descending.
    The full dim is always a legal block shape, so it is always included."""
    cands = [d for d in _divisors_desc(dim) if d % align == 0]
    if not cands or cands[0] != dim:
        cands = [dim] + cands
    return cands


def _block_bytes(tl, nb, tm, itemsize):
    # double-buffered input block + double-buffered output block + f32 acc
    return 2 * tl * nb * tm * itemsize + 2 * tl * tm * itemsize + tl * tm * 4


def _choose_tiles(tL_c, nB_c, tM_c, sub, itemsize, budget):
    cur = {"tL": tL_c[0], "nB": nB_c[0], "tM": tM_c[0]}
    cands = {"tL": tL_c, "nB": nB_c, "tM": tM_c}
    # Shrink order (perf review): tL first, then nB (keep >= 32 while we can),
    # then tM (keep >= 512); second round relaxes the floors.
    plan = [("tL", sub), ("nB", 32), ("tM", 512),
            ("nB", 1), ("tM", 1), ("tL", 1)]
    for name, floor in plan:
        while _block_bytes(cur["tL"], cur["nB"], cur["tM"], itemsize) > budget:
            nxt = next((c for c in cands[name] if c < cur[name] and c >= floor),
                       None)
            if nxt is None:     # no-progress break: cannot hang at trace time
                break
            cur[name] = nxt
    fits = _block_bytes(cur["tL"], cur["nB"], cur["tM"], itemsize) <= budget
    return cur["tL"], cur["nB"], cur["tM"], fits


# ------------------------------- wrapper -------------------------------------


def mean_readout(x, node_axis=1, *, min_pallas_bytes=None, vmem_budget_bytes=None):
    """Pallas equivalent of ModuleMeanReadout.forward.

    Returns (mean over `node_axis`, zeros((1, 1, 1), float32)).
    """
    node_axis = node_axis % x.ndim
    shape = x.shape
    N = shape[node_axis]
    L = math.prod(shape[:node_axis])
    M = math.prod(shape[node_axis + 1:])
    out_shape_final = shape[:node_axis] + shape[node_axis + 1:]

    zeros_out = jnp.zeros((1, 1, 1), dtype=jnp.float32)

    itemsize = jnp.dtype(x.dtype).itemsize
    total_bytes = int(x.size) * itemsize
    if min_pallas_bytes is None:
        min_pallas_bytes = _MIN_PALLAS_BYTES
    # Tiny readouts: pallas launch + pipeline prologue dominates.
    if total_bytes < min_pallas_bytes or N == 0 or L * M == 0:
        return jnp.mean(x, axis=node_axis), zeros_out

    # Row-major grouping reshape — free (no HBM transpose) for ANY node_axis.
    x3 = x.reshape(L, N, M)

    vmem_cap = _vmem_capacity_bytes()
    budget = int(0.70 * vmem_cap) if vmem_budget_bytes is None else int(vmem_budget_bytes)

    sub = max(1, 32 // itemsize)             # dtype sublane packing (8/16/32)
    tL_c = _tile_candidates(L, sub)
    nB_c = _tile_candidates(N, sub)
    tM_c = _tile_candidates(M, 128)

    tL, nB, tM, fits = _choose_tiles(tL_c, nB_c, tM_c, sub, itemsize, budget)
    if not fits:
        # Awkward (e.g. huge prime) dims with no aligned divisors: let XLA
        # handle it rather than emitting an over-budget / masked-layout block.
        return jnp.mean(x, axis=node_axis), zeros_out

    # Megacore / v7x: make sure at least one "parallel" grid axis has >= 2
    # blocks so both TensorCores get work.  Prefer splitting L (keeps the
    # lane-contiguous DMA run along M intact).  Splitting only shrinks blocks,
    # so the VMEM budget still holds.
    if L // tL < 2 and M // tM < 2:
        new_tL = next((c for c in tL_c if c <= L // 2), None)
        if new_tL is not None:
            tL = new_tL
        else:
            new_tM = next((c for c in tM_c if c <= M // 2), None)
            if new_tM is not None:
                tM = new_tM

    grid = (L // tL, M // tM, N // nB)

    needed = _block_bytes(tL, nB, tM, itemsize)
    # needed already accounts for double buffering; add headroom, stay below
    # physical VMEM (64 MiB / TC on v7x, 128 MiB on v5e/v6e).
    vmem_limit = int(min(max(needed + _VMEM_HEADROOM, 32 * 2**20),
                         max(vmem_cap - 4 * 2**20, 16 * 2**20)))

    cost = pl.CostEstimate(
        flops=L * N * M,
        transcendentals=0,
        bytes_accessed=total_bytes + L * M * itemsize,
    )

    unroll_nodes = nB if nB <= 8 else 0

    out2d = pl.pallas_call(
        functools.partial(_mean_over_nodes_kernel, inv_n=1.0 / N,
                          unroll_nodes=unroll_nodes),
        out_shape=jax.ShapeDtypeStruct((L, M), x.dtype),
        grid_spec=pltpu.PrefetchScalarGridSpec(
            num_scalar_prefetch=0,
            grid=grid,
            in_specs=[pl.BlockSpec((tL, nB, tM), lambda l, m, n: (l, n, m))],
            out_specs=pl.BlockSpec((tL, tM), lambda l, m, n: (l, m)),
            scratch_shapes=[pltpu.VMEM((tL, tM), jnp.float32)],
        ),
        compiler_params=pltpu.CompilerParams(
            dimension_semantics=("parallel", "parallel", "arbitrary"),
            vmem_limit_bytes=vmem_limit,
        ),
        cost_estimate=cost,
    )(x3)

    return out2d.reshape(out_shape_final), zeros_out


# --------------------------------- demo --------------------------------------

if __name__ == "__main__":
    key = jax.random.PRNGKey(0)
    k0, k1, k2 = jax.random.split(key, 3)

    # (time, nodes, batch, hidden) readout — small, forced through the Pallas
    # path (the default small-input fallback would route 8 KiB to jnp.mean).
    T, N, B, H = 2, 8, 4, 32
    x = jax.random.normal(k0, (T, N, B, H), dtype=jnp.float32)

    mean_out, zeros_out = mean_readout(x, node_axis=1, min_pallas_bytes=0)
    mean_out = jax.block_until_ready(mean_out)
    zeros_out = jax.block_until_ready(zeros_out)
    assert mean_out.shape == (T, B, H) and mean_out.dtype == x.dtype
    assert zeros_out.shape == (1, 1, 1) and zeros_out.dtype == jnp.float32
    assert jnp.allclose(mean_out, jnp.mean(x, axis=1), atol=1e-5, rtol=1e-5)
    assert jnp.all(zeros_out == 0.0)

    # Non-default node_axis: transpose-free (L, N, M) path + parallel split.
    m2, _ = mean_readout(x, node_axis=2, min_pallas_bytes=0)
    m2 = jax.block_until_ready(m2)
    assert jnp.allclose(m2, jnp.mean(x, axis=2), atol=1e-5, rtol=1e-5)

    # Tight budget override: exercises the shrink loops, a multi-step
    # reduction grid (N // nB > 1) and the accumulator init/finalize.
    xb = jax.random.normal(k1, (2, 32, 4, 64), dtype=jnp.float32)
    m3, _ = mean_readout(xb, node_axis=1, min_pallas_bytes=0,
                         vmem_budget_bytes=40_000)
    m3 = jax.block_until_ready(m3)
    assert jnp.allclose(m3, jnp.mean(xb, axis=1), atol=1e-5, rtol=1e-5)

    # Larger node count exercises the non-unrolled (jnp.sum) reduction path.
    xc = jax.random.normal(k2, (2, 64, 4, 64), dtype=jnp.float32)
    m4, _ = mean_readout(xc, node_axis=1, min_pallas_bytes=0)
    m4 = jax.block_until_ready(m4)
    assert jnp.allclose(m4, jnp.mean(xc, axis=1), atol=1e-5, rtol=1e-5)

    # bf16 exercises the dtype-aware sublane alignment + f32 accumulation.
    xh = x.astype(jnp.bfloat16)
    m5, _ = mean_readout(xh, node_axis=1, min_pallas_bytes=0)
    m5 = jax.block_until_ready(m5)
    assert m5.dtype == jnp.bfloat16
    assert jnp.allclose(m5.astype(jnp.float32),
                        jnp.mean(xh, axis=1).astype(jnp.float32),
                        atol=2e-2, rtol=2e-2)

    # Default path for tiny inputs: small-input fallback (still correct).
    m6, z6 = mean_readout(x, node_axis=1)
    m6 = jax.block_until_ready(m6)
    assert jnp.allclose(m6, jnp.mean(x, axis=1), atol=1e-5, rtol=1e-5)
    assert z6.shape == (1, 1, 1)

    print("KERNEL_OK")
</pallas_src>

<mosaic_0001>
module attributes {stable_mosaic.version = 11 : i64} {
  func.func @_mean_over_nodes_kernel(%arg0: i32, %arg1: i32, %arg2: i32, %arg3: memref<2x8x128xf32, #tpu.memory_space<vmem>>, %arg4: memref<2x128xf32, #tpu.memory_space<vmem>>, %arg5: memref<2x128xf32, #tpu.memory_space<vmem>>) attributes {dimension_semantics = [#tpu.dimension_semantics<parallel>, #tpu.dimension_semantics<parallel>, #tpu.dimension_semantics<arbitrary>], iteration_bounds = array<i64: 1, 1, 1>, scalar_prefetch = 0 : i64, scratch_operands = 1 : i64, tpu.core_type = #tpu.core_type<tc>, window_params = [{transform_indices = @transform_0, window_bounds = array<i64: 2, 8, 128>}, {transform_indices = @transform_1, window_bounds = array<i64: 2, 128>}]} {
    %c0_i32 = arith.constant 0 : i32
    %0 = arith.cmpi eq, %arg2, %c0_i32 : i32
    %1 = arith.extui %0 : i1 to i32
    %c0_i32_0 = arith.constant 0 : i32
    %2 = arith.cmpi ne, %1, %c0_i32_0 : i32
    scf.if %2 {
      %cst = arith.constant 0.000000e+00 : f32
      %32 = vector.broadcast %cst : f32 to vector<2x128xf32>
      %c0_23 = arith.constant 0 : index
      %c0_24 = arith.constant 0 : index
      %33 = vector.load %arg5[%c0_23, %c0_24] : memref<2x128xf32, #tpu.memory_space<vmem>>, vector<2x128xf32>
      tpu.vector_store %arg5[%c0_23, %c0_24], %32 {strides = array<i32>} : memref<2x128xf32, #tpu.memory_space<vmem>>, vector<2x128xf32>,
    } else {
    }
    %c0 = arith.constant 0 : index
    %c0_1 = arith.constant 0 : index
    %c0_2 = arith.constant 0 : index
    %3 = vector.load %arg3[%c0, %c0_1, %c0_2] : memref<2x8x128xf32, #tpu.memory_space<vmem>>, vector<2x1x128xf32>
    %4 = vector.shape_cast %3 : vector<2x1x128xf32> to vector<2x128xf32>
    %c0_3 = arith.constant 0 : index
    %c1 = arith.constant 1 : index
    %c0_4 = arith.constant 0 : index
    %5 = vector.load %arg3[%c0_3, %c1, %c0_4] : memref<2x8x128xf32, #tpu.memory_space<vmem>>, vector<2x1x128xf32>
    %6 = vector.shape_cast %5 : vector<2x1x128xf32> to vector<2x128xf32>
    %7 = arith.addf %4, %6 : vector<2x128xf32>
    %c0_5 = arith.constant 0 : index
    %c2 = arith.constant 2 : index
    %c0_6 = arith.constant 0 : index
    %8 = vector.load %arg3[%c0_5, %c2, %c0_6] : memref<2x8x128xf32, #tpu.memory_space<vmem>>, vector<2x1x128xf32>
    %9 = vector.shape_cast %8 : vector<2x1x128xf32> to vector<2x128xf32>
    %10 = arith.addf %7, %9 : vector<2x128xf32>
    %c0_7 = arith.constant 0 : index
    %c3 = arith.constant 3 : index
    %c0_8 = arith.constant 0 : index
    %11 = vector.load %arg3[%c0_7, %c3, %c0_8] : memref<2x8x128xf32, #tpu.memory_space<vmem>>, vector<2x1x128xf32>
    %12 = vector.shape_cast %11 : vector<2x1x128xf32> to vector<2x128xf32>
    %13 = arith.addf %10, %12 : vector<2x128xf32>
    %c0_9 = arith.constant 0 : index
    %c4 = arith.constant 4 : index
    %c0_10 = arith.constant 0 : index
    %14 = vector.load %arg3[%c0_9, %c4, %c0_10] : memref<2x8x128xf32, #tpu.memory_space<vmem>>, vector<2x1x128xf32>
    %15 = vector.shape_cast %14 : vector<2x1x128xf32> to vector<2x128xf32>
    %16 = arith.addf %13, %15 : vector<2x128xf32>
    %c0_11 = arith.constant 0 : index
    %c5 = arith.constant 5 : index
    %c0_12 = arith.constant 0 : index
    %17 = vector.load %arg3[%c0_11, %c5, %c0_12] : memref<2x8x128xf32, #tpu.memory_space<vmem>>, vector<2x1x128xf32>
    %18 = vector.shape_cast %17 : vector<2x1x128xf32> to vector<2x128xf32>
    %19 = arith.addf %16, %18 : vector<2x128xf32>
    %c0_13 = arith.constant 0 : index
    %c6 = arith.constant 6 : index
    %c0_14 = arith.constant 0 : index
    %20 = vector.load %arg3[%c0_13, %c6, %c0_14] : memref<2x8x128xf32, #tpu.memory_space<vmem>>, vector<2x1x128xf32>
    %21 = vector.shape_cast %20 : vector<2x1x128xf32> to vector<2x128xf32>
    %22 = arith.addf %19, %21 : vector<2x128xf32>
    %c0_15 = arith.constant 0 : index
    %c7 = arith.constant 7 : index
    %c0_16 = arith.constant 0 : index
    %23 = vector.load %arg3[%c0_15, %c7, %c0_16] : memref<2x8x128xf32, #tpu.memory_space<vmem>>, vector<2x1x128xf32>
    %24 = vector.shape_cast %23 : vector<2x1x128xf32> to vector<2x128xf32>
    %25 = arith.addf %22, %24 : vector<2x128xf32>
    %c0_17 = arith.constant 0 : index
    %c0_18 = arith.constant 0 : index
    %26 = vector.load %arg5[%c0_17, %c0_18] : memref<2x128xf32, #tpu.memory_space<vmem>>, vector<2x128xf32>
    %27 = arith.addf %26, %25 : vector<2x128xf32>
    %c0_19 = arith.constant 0 : index
    %c0_20 = arith.constant 0 : index
    %28 = vector.load %arg5[%c0_19, %c0_20] : memref<2x128xf32, #tpu.memory_space<vmem>>, vector<2x128xf32>
    tpu.vector_store %arg5[%c0_19, %c0_20], %27 {strides = array<i32>} : memref<2x128xf32, #tpu.memory_space<vmem>>, vector<2x128xf32>,
    %c0_i32_21 = arith.constant 0 : i32
    %29 = arith.cmpi eq, %arg2, %c0_i32_21 : i32
    %30 = arith.extui %29 : i1 to i32
    %c0_i32_22 = arith.constant 0 : i32
    %31 = arith.cmpi ne, %30, %c0_i32_22 : i32
    scf.if %31 {
      %c0_23 = arith.constant 0 : index
      %c0_24 = arith.constant 0 : index
      %32 = vector.load %arg5[%c0_23, %c0_24] : memref<2x128xf32, #tpu.memory_space<vmem>>, vector<2x128xf32>
      %cst = arith.constant 1.250000e-01 : f32
      %33 = vector.broadcast %cst : f32 to vector<2x128xf32>
      %34 = arith.mulf %32, %33 : vector<2x128xf32>
      %c0_25 = arith.constant 0 : index
      %c0_26 = arith.constant 0 : index
      %35 = vector.load %arg4[%c0_25, %c0_26] : memref<2x128xf32, #tpu.memory_space<vmem>>, vector<2x128xf32>
      tpu.vector_store %arg4[%c0_25, %c0_26], %34 {strides = array<i32>} : memref<2x128xf32, #tpu.memory_space<vmem>>, vector<2x128xf32>,
    } else {
    }
    return
  }
  func.func @transform_0(%arg0: i32, %arg1: i32, %arg2: i32) -> (i32, i32, i32) {
    %c0_i32 = arith.constant 0 : i32
    return %arg0, %arg2, %arg1 : i32, i32, i32
  }
  func.func @transform_1(%arg0: i32, %arg1: i32, %arg2: i32) -> (i32, i32) {
    %c0_i32 = arith.constant 0 : i32
    return %arg0, %arg1 : i32, i32
  }
}

</mosaic_0001>

<llo_original>
// kernel: tpu_custom_call.1
$region0: #{tpu_custom_call.1}
  #allocation0 [shape = 'u32[]', space=smem, size = 0x4, offset = 0x4, fixed_abs, tag = 'smem constant byte address 0x4 - core index']
  #allocation1 [shape = 'u32[144,128]{1,0:T(1,128)}', space=vmem, size = 0x12000, scoped, tag = 'internal scratch']
  #allocation2 [shape = 'f32[2,128]{1,0:T(2,128)}', space=vmem, size = 0x400, scoped, tag = 'scratch operand']
  %s0 = inlined_call_operand.hbm [shape: f32[2,8,128], index: 0, kind: input, shape index: {}]
  %s1 = inlined_call_operand.hbm [shape: f32[2,128], index: 1, kind: output, shape index: {}]
  %s2 = sld [smem:[#allocation0]]
  $region26: #{tpu_custom_call.1} parent=0
    _
  %s4 = ssub.s32 1, %s2
  %s5 = scalar_select 0, %s4, %s2
  $region1: #{tpu_custom_call.1} parent=0
    #allocation3 [shape = 'u8[8192]{0}', space=vmem, size = 0x2000, scoped, tag = 'input window, operand 0, single buffered']
    #allocation4 [shape = 's32[1]{0}', space=sflag, size = 0x4, scoped, tag = 'scoped memory for tpu_custom_call.1']
    #allocation5 [shape = 's32[1]{0}', space=sflag, size = 0x4, scoped, tag = 'scoped memory for tpu_custom_call.1']
    #allocation6 [shape = 'u8[1024]{0}', space=vmem, size = 0x400, scoped, tag = 'output window, operand 0, single buffered']
    %6 = vsyncpa [#allocation4], 0
    %7 = vsyncpa [#allocation5], 0
    // Predicated region
    $region2: #{tpu_custom_call.1} parent=1 // pred_check
      _
    $region3: #{tpu_custom_call.1} parent=1 // pred_check_branch
      %9 = sbr.rel (0) target = $region5
    $region4: #{tpu_custom_call.1} parent=1 // pred_region
      %s11 = ssub.s32 256, 256
      %12 = vsyncadd [#allocation4], %s11
      %s13 = sshll.u32 [#allocation3], 4
      %s14 = int_to_ptr.vmem [resolvable:$true] %s13
      %19 = dma.hbm_to_vmem [thread:$0]  %s0, 256, %s14, [#allocation4], 128, 128, 8
    $region5: #{tpu_custom_call.1} parent=1 // pred_fallthru
      _
    // Predicated region
    $region6: #{tpu_custom_call.1} parent=1 // pred_check
      _
    $region7: #{tpu_custom_call.1} parent=1 // pred_check_branch
      %21 = sbr.rel (0) target = $region9
    $region8: #{tpu_custom_call.1} parent=1 // pred_region
      %22 = dma.done [#allocation4], 256
    $region9: #{tpu_custom_call.1} parent=1 // pred_fallthru
      _
    %p23 = scmp.eq.s32.totalorder 0, 0
    // Predicated region
    $region10: #{tpu_custom_call.1} parent=1 // pred_check
      %p24 = pneg %p23
    $region11: #{tpu_custom_call.1} parent=1 // pred_check_branch
      %26 = sbr.rel (%p24) target = $region13
    $region12: #{tpu_custom_call.1} parent=1 // pred_region
      %27 = vst [vmem:[#allocation2] sm:$0x3] 0.0
    $region13: #{tpu_custom_call.1} parent=1 // pred_fallthru
      _
    %v28 = vld [vmem:[#allocation3] sm:$0x1]
    %v29 = vld [vmem:[#allocation3 + $0x8] sm:$0x1]
    %v30 = vld [vmem:[#allocation3 + $0x1] sm:$0x1]
    %v31 = vld [vmem:[#allocation3 + $0x9] sm:$0x1]
    %v32 = vadd.f32 %v28, %v30
    %v33 = vadd.f32 %v29, %v31
    %v34 = vld [vmem:[#allocation3 + $0x2] sm:$0x1]
    %v35 = vld [vmem:[#allocation3 + $0xa] sm:$0x1]
    %v36 = vadd.f32 %v32, %v34
    %v37 = vadd.f32 %v33, %v35
    %v38 = vld [vmem:[#allocation3 + $0x3] sm:$0x1]
    %v39 = vld [vmem:[#allocation3 + $0xb] sm:$0x1]
    %v40 = vadd.f32 %v36, %v38
    %v41 = vadd.f32 %v37, %v39
    %v42 = vld [vmem:[#allocation3 + $0x4] sm:$0x1]
    %v43 = vld [vmem:[#allocation3 + $0xc] sm:$0x1]
    %v44 = vadd.f32 %v40, %v42
    %v45 = vadd.f32 %v41, %v43
    %v46 = vld [vmem:[#allocation3 + $0x5] sm:$0x1]
    %v47 = vld [vmem:[#allocation3 + $0xd] sm:$0x1]
    %v48 = vadd.f32 %v44, %v46
    %v49 = vadd.f32 %v45, %v47
    %v50 = vld [vmem:[#allocation3 + $0x6] sm:$0x1]
    %v51 = vld [vmem:[#allocation3 + $0xe] sm:$0x1]
    %v52 = vadd.f32 %v48, %v50
    %v53 = vadd.f32 %v49, %v51
    %v54 = vld [vmem:[#allocation3 + $0x7] sm:$0x1]
    %v55 = vld [vmem:[#allocation3 + $0xf] sm:$0x1]
    %v56 = vadd.f32 %v52, %v54
    %v57 = vadd.f32 %v53, %v55
    %v58 = vld [vmem:[#allocation2] sm:$0x3]
    %v61 = vrot.slane %v57, 7
    %vm62 = vcmask 1041409
    %v63 = vsel %vm62, %v61, %v56
    %v65 = vadd.f32 %v58, %v63
    %66 = vst [vmem:[#allocation2] sm:$0x3] %v65
    // Predicated region
    $region14: #{tpu_custom_call.1} parent=1 // pred_check
      %p67 = pneg %p23
    $region15: #{tpu_custom_call.1} parent=1 // pred_check_branch
      %69 = sbr.rel (%p67) target = $region17
    $region16: #{tpu_custom_call.1} parent=1 // pred_region
      %v70 = vld [vmem:[#allocation2] sm:$0x3]
      %v71 = vmul.f32 %v70, 0.125
      %72 = vst [vmem:[#allocation6] sm:$0x3] %v71
    $region17: #{tpu_custom_call.1} parent=1 // pred_fallthru
      _
    // Predicated region
    $region18: #{tpu_custom_call.1} parent=1 // pred_check
      _
    $region19: #{tpu_custom_call.1} parent=1 // pred_check_branch
      %74 = sbr.rel (0) target = $region21
    $region20: #{tpu_custom_call.1} parent=1 // pred_region
      %s76 = ssub.s32 32, 32
      %77 = vsyncadd [#allocation5], %s76
      %s79 = sshll.u32 [#allocation6], 4
      %s80 = int_to_ptr.vmem [resolvable:$true] %s79
      %82 = dma.vmem_to_hbm [thread:$0]  %s80, 32, %s1, [#allocation5]
    $region21: #{tpu_custom_call.1} parent=1 // pred_fallthru
      _
    // Predicated region
    $region22: #{tpu_custom_call.1} parent=1 // pred_check
      _
    $region23: #{tpu_custom_call.1} parent=1 // pred_check_branch
      %84 = sbr.rel (0) target = $region25
    $region24: #{tpu_custom_call.1} parent=1 // pred_region
      %85 = dma.done [#allocation5], 32
    $region25: #{tpu_custom_call.1} parent=1 // pred_fallthru
      _
    %86 = vsyncpa [#allocation4], 1
    %87 = vsyncpa [#allocation5], 1

</llo_original>
